<compile_context>
chip_gen: v7x
topology: tpu7x:2x2x1
jax: 0.10.0
libtpu: 0.0.40
codegen_flags: <defaults>
</compile_context>

<pallas_src>
import functools

import jax
import jax.numpy as jnp
from jax.experimental import pallas as pl
from jax.experimental.pallas import tpu as pltpu

EPS = 1e-6  # AddAndNorm / LayerNormalization epsilon


# --------------------------- fused kernel body --------------------------------
def _fused_residual_kernel(seed_ref, x_ref, gamma_ref, beta_ref, w_ref, b_ref,
                           o_ref, *, drop_threshold, inv_keep, row_tile):
    """One row tile: o = x + dropout(layernorm(x) @ W + b)."""
    x = x_ref[...].astype(jnp.float32)                       # (TR, F)

    # ---- LayerNorm over the feature (lane) axis -------------------------
    mean = jnp.mean(x, axis=-1, keepdims=True)
    xc = x - mean
    var = jnp.mean(xc * xc, axis=-1, keepdims=True)
    normed = xc * jax.lax.rsqrt(var + EPS)
    normed = (normed * gamma_ref[...].astype(jnp.float32)
              + beta_ref[...].astype(jnp.float32))

    # ---- Linear sublayer on the MXU (bf16 inputs, f32 accumulate) --------
    y = jnp.dot(normed.astype(jnp.bfloat16),
                w_ref[...].astype(jnp.bfloat16),
                preferred_element_type=jnp.float32)
    y = y + b_ref[...].astype(jnp.float32)

    # ---- Inverted dropout via counter-based hash PRNG --------------------
    # (portable: no pltpu.prng_* which has no CPU-interpret lowering)
    if drop_threshold > 0:
        tr, f = y.shape
        tile = pl.program_id(0)
        row = jax.lax.broadcasted_iota(jnp.uint32, (tr, f), 0)
        col = jax.lax.broadcasted_iota(jnp.uint32, (tr, f), 1)
        # Global element counter -> every tile draws a distinct random stream.
        row0 = (tile * row_tile).astype(jnp.uint32)
        ctr = (row + row0) * jnp.uint32(f) + col
        key = seed_ref[0].astype(jnp.uint32)
        h = ctr + key * jnp.uint32(0x9E3779B9)
        h = (h ^ (h >> 16)) * jnp.uint32(0x7FEB352D)
        h = (h ^ (h >> 15)) * jnp.uint32(0x846CA68B)
        h = h ^ (h >> 16)
        # Integer threshold compare: P(drop) = drop_threshold / 2^32 == p.
        keep = h >= jnp.uint32(drop_threshold)
        y = jnp.where(keep, y * inv_keep, 0.0)

    # ---- Residual add -----------------------------------------------------
    o_ref[...] = (x + y).astype(o_ref.dtype)


# ------------------------------ tiling helper ----------------------------------
def _pick_row_tile(n_rows, n_feat):
    """Largest sublane-aligned row tile that divides n_rows, capped so a single
    f32 (TR, F) tile stays ~2 MiB (double-buffered x/out + resident W/params fit
    easily under v7x's 64 MiB VMEM; plenty big to amortize per-step overhead)."""
    cap = max(8, (2 * 1024 * 1024) // (4 * n_feat))
    for tr in (2048, 1024, 512, 256, 128, 64, 32, 16, 8):
        if tr <= cap and n_rows % tr == 0:
            return tr
    return n_rows  # fallback: one full block (handles n_rows not multiple of 8)


# -------------------------------- wrapper --------------------------------------
def residual_connection(x, gamma, beta, w, b, *, dropout_p, seed):
    """out = x + dropout(Linear(layernorm(x))); x is (batch, seq, features)."""
    assert 0.0 <= float(dropout_p) < 1.0
    B, S, F = x.shape
    R = B * S
    x2d = x.reshape(R, F)

    tr = _pick_row_tile(R, F)
    grid = (R // tr,)

    seed_arr = jnp.asarray([seed], dtype=jnp.int32)
    p = float(dropout_p)
    drop_threshold = int(round(p * (1 << 32))) if p > 0.0 else 0
    inv_keep = (1.0 / (1.0 - p)) if p > 0.0 else 1.0

    kernel = functools.partial(
        _fused_residual_kernel,
        drop_threshold=drop_threshold,
        inv_keep=inv_keep,
        row_tile=tr,
    )

    out2d = pl.pallas_call(
        kernel,
        out_shape=jax.ShapeDtypeStruct((R, F), x.dtype),
        grid_spec=pltpu.PrefetchScalarGridSpec(
            num_scalar_prefetch=1,          # seed lives in SMEM
            grid=grid,
            in_specs=[
                # streamed row tile of x (double-buffered by the pipeline)
                pl.BlockSpec((tr, F), lambda i, seed: (i, 0)),
                # params: same block every step -> stay resident in VMEM
                pl.BlockSpec((1, F), lambda i, seed: (0, 0)),   # gamma
                pl.BlockSpec((1, F), lambda i, seed: (0, 0)),   # beta
                pl.BlockSpec((F, F), lambda i, seed: (0, 0)),   # W
                pl.BlockSpec((1, F), lambda i, seed: (0, 0)),   # bias
            ],
            out_specs=pl.BlockSpec((tr, F), lambda i, seed: (i, 0)),
        ),
        compiler_params=pltpu.CompilerParams(
            # independent row tiles -> shard across TensorCores (v7x megacore)
            dimension_semantics=("parallel",),
        ),
        # TODO(synk): add input_output_aliases={1: 0} when callers donate x
        # (skips a second RxF HBM buffer); left off since x may still be live.
    )(seed_arr, x2d, gamma.reshape(1, F), beta.reshape(1, F), w, b.reshape(1, F))

    return out2d.reshape(B, S, F)


# --------------------------------- demo ----------------------------------------
if __name__ == "__main__":
    # features chosen as a multiple of 128 -> lane-dense vregs / unmasked stores
    B, S, F = 2, 8, 128
    dropout_p = 0.1

    key = jax.random.PRNGKey(0)
    kx, kg, kb, kw, kbias = jax.random.split(key, 5)

    x = jax.random.normal(kx, (B, S, F), dtype=jnp.float32)
    gamma = 1.0 + 0.05 * jax.random.normal(kg, (F,), dtype=jnp.float32)
    beta = 0.05 * jax.random.normal(kb, (F,), dtype=jnp.float32)
    w = jax.random.normal(kw, (F, F), dtype=jnp.float32) / jnp.sqrt(F)
    bias = 0.01 * jax.random.normal(kbias, (F,), dtype=jnp.float32)

    # 1) deterministic path (dropout disabled) vs. pure-JAX reference
    out_nodrop = residual_connection(x, gamma, beta, w, bias,
                                     dropout_p=0.0, seed=0)
    jax.block_until_ready(out_nodrop)
    mean = jnp.mean(x, axis=-1, keepdims=True)
    var = jnp.mean((x - mean) ** 2, axis=-1, keepdims=True)
    normed_ref = (x - mean) * jax.lax.rsqrt(var + EPS) * gamma + beta
    ref = x + (jnp.einsum("bsf,fg->bsg", normed_ref, w) + bias)
    assert jnp.allclose(out_nodrop, ref, atol=5e-2, rtol=5e-2), "fused path mismatch"

    # 2) training path with dropout enabled
    out = residual_connection(x, gamma, beta, w, bias,
                              dropout_p=dropout_p, seed=1234)
    jax.block_until_ready(out)
    assert out.shape == (B, S, F) and out.dtype == x.dtype
    assert bool(jnp.all(jnp.isfinite(out)))

    print("KERNEL_OK")
</pallas_src>

<mosaic_0001>
module attributes {stable_mosaic.version = 11 : i64} {
  func.func @_fused_residual_kernel(%arg0: i32, %arg1: memref<1xi32, #tpu.memory_space<smem>>, %arg2: memref<16x128xf32, #tpu.memory_space<vmem>>, %arg3: memref<1x128xf32, #tpu.memory_space<vmem>>, %arg4: memref<1x128xf32, #tpu.memory_space<vmem>>, %arg5: memref<128x128xf32, #tpu.memory_space<vmem>>, %arg6: memref<1x128xf32, #tpu.memory_space<vmem>>, %arg7: memref<16x128xf32, #tpu.memory_space<vmem>>) attributes {dimension_semantics = [#tpu.dimension_semantics<parallel>], iteration_bounds = array<i64: 1>, scalar_prefetch = 1 : i64, scratch_operands = 0 : i64, tpu.core_type = #tpu.core_type<tc>, window_params = [{transform_indices = @transform_0, window_bounds = array<i64: 16, 128>}, {pipeline_mode = #tpu.pipeline_mode<synchronous>, transform_indices = @transform_1, window_bounds = array<i64: 1, 128>}, {pipeline_mode = #tpu.pipeline_mode<synchronous>, transform_indices = @transform_2, window_bounds = array<i64: 1, 128>}, {pipeline_mode = #tpu.pipeline_mode<synchronous>, transform_indices = @transform_3, window_bounds = array<i64: 128, 128>}, {pipeline_mode = #tpu.pipeline_mode<synchronous>, transform_indices = @transform_4, window_bounds = array<i64: 1, 128>}, {transform_indices = @transform_5, window_bounds = array<i64: 16, 128>}]} {
    %c0 = arith.constant 0 : index
    %c0_0 = arith.constant 0 : index
    %0 = vector.load %arg2[%c0, %c0_0] : memref<16x128xf32, #tpu.memory_space<vmem>>, vector<16x128xf32>
    %cst = arith.constant dense<0.000000e+00> : vector<16xf32>
    %1 = vector.multi_reduction <add>, %0, %cst [1] : vector<16x128xf32> to vector<16xf32>
    %2 = vector.shape_cast %1 : vector<16xf32> to vector<16x1xf32>
    %cst_1 = arith.constant 1.280000e+02 : f32
    %3 = vector.broadcast %cst_1 : f32 to vector<16x1xf32>
    %4 = arith.divf %2, %3 : vector<16x1xf32>
    %5 = vector.broadcast %4 : vector<16x1xf32> to vector<16x128xf32>
    %6 = arith.subf %0, %5 : vector<16x128xf32>
    %7 = arith.mulf %6, %6 : vector<16x128xf32>
    %cst_2 = arith.constant dense<0.000000e+00> : vector<16xf32>
    %8 = vector.multi_reduction <add>, %7, %cst_2 [1] : vector<16x128xf32> to vector<16xf32>
    %9 = vector.shape_cast %8 : vector<16xf32> to vector<16x1xf32>
    %cst_3 = arith.constant 1.280000e+02 : f32
    %10 = vector.broadcast %cst_3 : f32 to vector<16x1xf32>
    %11 = arith.divf %9, %10 : vector<16x1xf32>
    %cst_4 = arith.constant 9.99999997E-7 : f32
    %12 = vector.broadcast %cst_4 : f32 to vector<16x1xf32>
    %13 = arith.addf %11, %12 : vector<16x1xf32>
    %14 = math.rsqrt %13 : vector<16x1xf32>
    %15 = vector.broadcast %14 : vector<16x1xf32> to vector<16x128xf32>
    %16 = arith.mulf %6, %15 : vector<16x128xf32>
    %c0_5 = arith.constant 0 : index
    %c0_6 = arith.constant 0 : index
    %17 = vector.load %arg3[%c0_5, %c0_6] : memref<1x128xf32, #tpu.memory_space<vmem>>, vector<1x128xf32>
    %18 = vector.broadcast %17 : vector<1x128xf32> to vector<16x128xf32>
    %19 = arith.mulf %16, %18 : vector<16x128xf32>
    %c0_7 = arith.constant 0 : index
    %c0_8 = arith.constant 0 : index
    %20 = vector.load %arg4[%c0_7, %c0_8] : memref<1x128xf32, #tpu.memory_space<vmem>>, vector<1x128xf32>
    %21 = vector.broadcast %20 : vector<1x128xf32> to vector<16x128xf32>
    %22 = arith.addf %19, %21 : vector<16x128xf32>
    %23 = arith.truncf %22 : vector<16x128xf32> to vector<16x128xbf16>
    %c0_9 = arith.constant 0 : index
    %c0_10 = arith.constant 0 : index
    %24 = vector.load %arg5[%c0_9, %c0_10] : memref<128x128xf32, #tpu.memory_space<vmem>>, vector<128x128xf32>
    %25 = arith.truncf %24 : vector<128x128xf32> to vector<128x128xbf16>
    %cst_11 = arith.constant dense<0.000000e+00> : vector<16x128xf32>
    %26 = tpu.matmul %23, %25, %cst_11 {dimension_numbers = #tpu.dot_dimension_numbers<[1], [0], [0], [1], [0, 0, 1, 1], [], []>} : vector<16x128xbf16>, vector<128x128xbf16>, vector<16x128xf32> -> vector<16x128xf32>
    %c0_12 = arith.constant 0 : index
    %c0_13 = arith.constant 0 : index
    %27 = vector.load %arg6[%c0_12, %c0_13] : memref<1x128xf32, #tpu.memory_space<vmem>>, vector<1x128xf32>
    %28 = vector.broadcast %27 : vector<1x128xf32> to vector<16x128xf32>
    %29 = arith.addf %26, %28 : vector<16x128xf32>
    %30 = arith.addf %0, %29 : vector<16x128xf32>
    %c0_14 = arith.constant 0 : index
    %c0_15 = arith.constant 0 : index
    %31 = vector.load %arg7[%c0_14, %c0_15] : memref<16x128xf32, #tpu.memory_space<vmem>>, vector<16x128xf32>
    tpu.vector_store %arg7[%c0_14, %c0_15], %30 {strides = array<i32>} : memref<16x128xf32, #tpu.memory_space<vmem>>, vector<16x128xf32>,
    return
  }
  func.func @transform_0(%arg0: i32, %arg1: memref<1xi32, #tpu.memory_space<smem>>) -> (i32, i32) {
    %c0_i32 = arith.constant 0 : i32
    %c0_i32_0 = arith.constant 0 : i32
    return %arg0, %c0_i32 : i32, i32
  }
  func.func @transform_1(%arg0: i32, %arg1: memref<1xi32, #tpu.memory_space<smem>>) -> (i32, i32) {
    %c0_i32 = arith.constant 0 : i32
    %c0_i32_0 = arith.constant 0 : i32
    %c0_i32_1 = arith.constant 0 : i32
    return %c0_i32, %c0_i32_0 : i32, i32
  }
  func.func @transform_2(%arg0: i32, %arg1: memref<1xi32, #tpu.memory_space<smem>>) -> (i32, i32) {
    %c0_i32 = arith.constant 0 : i32
    %c0_i32_0 = arith.constant 0 : i32
    %c0_i32_1 = arith.constant 0 : i32
    return %c0_i32, %c0_i32_0 : i32, i32
  }
  func.func @transform_3(%arg0: i32, %arg1: memref<1xi32, #tpu.memory_space<smem>>) -> (i32, i32) {
    %c0_i32 = arith.constant 0 : i32
    %c0_i32_0 = arith.constant 0 : i32
    %c0_i32_1 = arith.constant 0 : i32
    return %c0_i32, %c0_i32_0 : i32, i32
  }
  func.func @transform_4(%arg0: i32, %arg1: memref<1xi32, #tpu.memory_space<smem>>) -> (i32, i32) {
    %c0_i32 = arith.constant 0 : i32
    %c0_i32_0 = arith.constant 0 : i32
    %c0_i32_1 = arith.constant 0 : i32
    return %c0_i32, %c0_i32_0 : i32, i32
  }
  func.func @transform_5(%arg0: i32, %arg1: memref<1xi32, #tpu.memory_space<smem>>) -> (i32, i32) {
    %c0_i32 = arith.constant 0 : i32
    %c0_i32_0 = arith.constant 0 : i32
    return %arg0, %c0_i32 : i32, i32
  }
}

</mosaic_0001>

<llo_original>
// kernel: tpu_custom_call.1
$region0: #{tpu_custom_call.1}
  #allocation0 [shape = 'u32[]', space=smem, size = 0x4, offset = 0x4, fixed_abs, tag = 'smem constant byte address 0x4 - core index']
  #allocation1 [shape = 'u32[144,128]{1,0:T(1,128)}', space=vmem, size = 0x12000, scoped, tag = 'internal scratch']
  #allocation2 [shape = 's32[1]{0}', space=sflag, size = 0x4, scoped, tag = 'scoped memory for tpu_custom_call.1']
  #allocation3 [shape = 's32[1]{0:T(128)S(6)}', space=smem, size = 0x200, scoped, tag = 'prefetched SMEM operand 0']
  %s0 = inlined_call_operand.<no memory space> [shape: s32[1], index: 0, kind: input, shape index: {}]
  %s1 = inlined_call_operand.hbm [shape: f32[16,128], index: 1, kind: input, shape index: {}]
  %s2 = inlined_call_operand.vmem [shape: f32[1,128], index: 2, kind: input, shape index: {}]
  %s3 = inlined_call_operand.vmem [shape: f32[1,128], index: 3, kind: input, shape index: {}]
  %s4 = inlined_call_operand.hbm [shape: f32[128,128], index: 4, kind: input, shape index: {}]
  %s5 = inlined_call_operand.vmem [shape: f32[1,128], index: 5, kind: input, shape index: {}]
  %s6 = inlined_call_operand.hbm [shape: f32[16,128], index: 6, kind: output, shape index: {}]
  %s7 = sld [smem:[#allocation0]]
  $region38: #{tpu_custom_call.1} parent=0
    _
  %s9 = ssub.s32 1, %s7
  %s10 = scalar_select 0, %s9, %s7
  %11 = sst [smem:[#allocation3]] %s0
  $region1: #{tpu_custom_call.1} parent=0
    #allocation4 [shape = 'u8[8192]{0}', space=vmem, size = 0x2000, scoped, tag = 'input window, operand 1, single buffered']
    #allocation5 [shape = 's32[1]{0}', space=sflag, size = 0x4, scoped, tag = 'scoped memory for tpu_custom_call.1']
    #allocation6 [shape = 's32[1]{0}', space=sflag, size = 0x4, scoped, tag = 'scoped memory for tpu_custom_call.1']
    #allocation7 [shape = 'u8[65536]{0}', space=vmem, size = 0x10000, scoped, tag = 'input window, operand 4, single buffered']
    #allocation8 [shape = 's32[1]{0}', space=sflag, size = 0x4, scoped, tag = 'scoped memory for tpu_custom_call.1']
    #allocation9 [shape = 'u8[8192]{0}', space=vmem, size = 0x2000, scoped, tag = 'output window, operand 0, single buffered']
    %12 = vsyncpa [#allocation5], 0
    %13 = vsyncpa [#allocation8], 0
    %14 = vsyncpa [#allocation6], 0
    // Predicated region
    $region2: #{tpu_custom_call.1} parent=1 // pred_check
      _
    $region3: #{tpu_custom_call.1} parent=1 // pred_check_branch
      %16 = sbr.rel (0) target = $region5
    $region4: #{tpu_custom_call.1} parent=1 // pred_region
      %s18 = ssub.s32 256, 256
      %19 = vsyncadd [#allocation5], %s18
      %s20 = sshll.u32 [#allocation4], 4
      %s21 = int_to_ptr.vmem [resolvable:$true] %s20
      %26 = dma.hbm_to_vmem [thread:$0]  %s1, 256, %s21, [#allocation5], 128, 128, 8
    $region5: #{tpu_custom_call.1} parent=1 // pred_fallthru
      _
    // Predicated region
    $region6: #{tpu_custom_call.1} parent=1 // pred_check
      _
    $region7: #{tpu_custom_call.1} parent=1 // pred_check_branch
      %28 = sbr.rel (0) target = $region9
    $region8: #{tpu_custom_call.1} parent=1 // pred_region
      _
    $region9: #{tpu_custom_call.1} parent=1 // pred_fallthru
      _
    // Predicated region
    $region10: #{tpu_custom_call.1} parent=1 // pred_check
      _
    $region11: #{tpu_custom_call.1} parent=1 // pred_check_branch
      %30 = sbr.rel (0) target = $region13
    $region12: #{tpu_custom_call.1} parent=1 // pred_region
      _
    $region13: #{tpu_custom_call.1} parent=1 // pred_fallthru
      _
    // Predicated region
    $region14: #{tpu_custom_call.1} parent=1 // pred_check
      _
    $region15: #{tpu_custom_call.1} parent=1 // pred_check_branch
      %32 = sbr.rel (0) target = $region17
    $region16: #{tpu_custom_call.1} parent=1 // pred_region
      %s34 = ssub.s32 2048, 2048
      %35 = vsyncadd [#allocation8], %s34
      %s36 = sshll.u32 [#allocation7], 4
      %s37 = int_to_ptr.vmem [resolvable:$true] %s36
      %42 = dma.hbm_to_vmem [thread:$0]  %s4, 2048, %s37, [#allocation8], 128, 128, 8
    $region17: #{tpu_custom_call.1} parent=1 // pred_fallthru
      _
    // Predicated region
    $region18: #{tpu_custom_call.1} parent=1 // pred_check
      _
    $region19: #{tpu_custom_call.1} parent=1 // pred_check_branch
      %44 = sbr.rel (0) target = $region21
    $region20: #{tpu_custom_call.1} parent=1 // pred_region
      _
    $region21: #{tpu_custom_call.1} parent=1 // pred_fallthru
      _
    // Predicated region
    $region22: #{tpu_custom_call.1} parent=1 // pred_check
      _
    $region23: #{tpu_custom_call.1} parent=1 // pred_check_branch
      %46 = sbr.rel (0) target = $region25
    $region24: #{tpu_custom_call.1} parent=1 // pred_region
      %47 = dma.done [#allocation5], 256
    $region25: #{tpu_custom_call.1} parent=1 // pred_fallthru
      _
    // Predicated region
    $region26: #{tpu_custom_call.1} parent=1 // pred_check
      _
    $region27: #{tpu_custom_call.1} parent=1 // pred_check_branch
      %49 = sbr.rel (0) target = $region29
    $region28: #{tpu_custom_call.1} parent=1 // pred_region
      %50 = dma.done [#allocation8], 2048
    $region29: #{tpu_custom_call.1} parent=1 // pred_fallthru
      _
    %v52 = vld [vmem:[#allocation4] sm:$0xff]
    %v53 = vld [vmem:[#allocation4 + $0x8] sm:$0xff]
    %54 = vadd.xlane.f32.xlu0 %v52
    %v55 = vpop.xlane.xlu0 %54
    %56 = vadd.xlane.f32.xlu0 %v53
    %v57 = vpop.xlane.xlu0 %56
    %v58 = vrcp.pop 128.0
    %v59 = vmul.f32 %v55, %v58
    %v60 = vmul.f32 %v57, %v58
    %v61 = vsub.f32 %v52, %v59
    %v62 = vsub.f32 %v53, %v60
    %v63 = vmul.f32 %v61, %v61
    %v64 = vmul.f32 %v62, %v62
    %65 = vadd.xlane.f32.xlu0 %v63
    %v66 = vpop.xlane.xlu0 %65
    %67 = vadd.xlane.f32.xlu0 %v64
    %v68 = vpop.xlane.xlu0 %67
    %v69 = vmul.f32 %v66, %v58
    %v70 = vmul.f32 %v68, %v58
    %v71 = vadd.f32 %v69, 1e-06
    %v72 = vadd.f32 %v70, 1e-06
    %v73 = vrsqrt.pop %v71
    %v74 = vrsqrt.pop %v72
    %v75 = vmul.f32 %v61, %v73
    %v76 = vmul.f32 %v62, %v74
    %v77 = vld [vmem:[%s2] sm:$0x1]
    %v79 = vlaneseq
    %v80 = vshrl.u32 %v79, 7
    %v81 = vsub.s32 0, %v80
    %v82 = vrot.slane %v77, %v81
    %v84 = vmul.f32 %v75, %v82
    %v85 = vmul.f32 %v76, %v82
    %v86 = vld [vmem:[%s3] sm:$0x1]
    %v88 = vlaneseq
    %v89 = vshrl.u32 %v88, 7
    %v90 = vsub.s32 0, %v89
    %v91 = vrot.slane %v86, %v90
    %v93 = vadd.f32 %v84, %v91
    %v94 = vadd.f32 %v85, %v91
    %v95 = vpack.c.bf16 %v94, %v93
    %v96 = vld [vmem:[#allocation7] sm:$0xff]
    %v97 = vld [vmem:[#allocation7 + $0x8] sm:$0xff]
    %v98 = vld [vmem:[#allocation7 + $0x10] sm:$0xff]
    %v99 = vld [vmem:[#allocation7 + $0x18] sm:$0xff]
    %v100 = vld [vmem:[#allocation7 + $0x20] sm:$0xff]
    %v101 = vld [vmem:[#allocation7 + $0x28] sm:$0xff]
    %v102 = vld [vmem:[#allocation7 + $0x30] sm:$0xff]
    %v103 = vld [vmem:[#allocation7 + $0x38] sm:$0xff]
    %v104 = vld [vmem:[#allocation7 + $0x40] sm:$0xff]
    %v105 = vld [vmem:[#allocation7 + $0x48] sm:$0xff]
    %v106 = vld [vmem:[#allocation7 + $0x50] sm:$0xff]
    %v107 = vld [vmem:[#allocation7 + $0x58] sm:$0xff]
    %v108 = vld [vmem:[#allocation7 + $0x60] sm:$0xff]
    %v109 = vld [vmem:[#allocation7 + $0x68] sm:$0xff]
    %v110 = vld [vmem:[#allocation7 + $0x70] sm:$0xff]
    %v111 = vld [vmem:[#allocation7 + $0x78] sm:$0xff]
    %v112 = vpack.c.bf16 %v97, %v96
    %v113 = vpack.c.bf16 %v99, %v98
    %v114 = vpack.c.bf16 %v101, %v100
    %v115 = vpack.c.bf16 %v103, %v102
    %v116 = vpack.c.bf16 %v105, %v104
    %v117 = vpack.c.bf16 %v107, %v106
    %v118 = vpack.c.bf16 %v109, %v108
    %v119 = vpack.c.bf16 %v111, %v110
    %v120 = vld [vmem:[%s5] sm:$0x1]
    %v122 = vlaneseq
    %v123 = vshrl.u32 %v122, 7
    %v124 = vsub.s32 0, %v123
    %v125 = vrot.slane %v120, %v124
    %127 = vmatprep.subr.bf16.mxu0 0
    %128 = vmatpush1.bf16.msra.mxu0 %v112
    %129 = vmatprep.subr.bf16.mxu0 0
    %130 = vmatpush1.bf16.msra.mxu0 %v113
    %131 = vmatprep.subr.bf16.mxu0 0
    %132 = vmatpush1.bf16.msra.mxu0 %v114
    %133 = vmatprep.subr.bf16.mxu0 0
    %134 = vmatpush1.bf16.msra.mxu0 %v115
    %135 = vmatprep.subr.bf16.mxu0 0
    %136 = vmatpush1.bf16.msra.mxu0 %v116
    %137 = vmatprep.subr.bf16.mxu0 0
    %138 = vmatpush1.bf16.msra.mxu0 %v117
    %139 = vmatprep.subr.bf16.mxu0 0
    %140 = vmatpush1.bf16.msra.mxu0 %v118
    %141 = vmatprep.subr.bf16.mxu0 0
    %142 = vmatpush1.bf16.msra.mxu0 %v119
    %143 = vmatprep.subr.bf16.mxu0 0
    %144 = vmatpush1.bf16.msra.mxu0 0
    %145 = vmatprep.subr.bf16.mxu0 0
    %146 = vmatpush1.bf16.msra.mxu0 0
    %147 = vmatprep.subr.bf16.mxu0 0
    %148 = vmatpush1.bf16.msra.mxu0 0
    %149 = vmatprep.subr.bf16.mxu0 0
    %150 = vmatpush1.bf16.msra.mxu0 0
    %151 = vmatprep.subr.bf16.mxu0 0
    %152 = vmatpush1.bf16.msra.mxu0 0
    %153 = vmatprep.subr.bf16.mxu0 0
    %154 = vmatpush1.bf16.msra.mxu0 0
    %155 = vmatprep.subr.bf16.mxu0 0
    %156 = vmatpush1.bf16.msra.mxu0 0
    %157 = vmatprep.subr.bf16.mxu0 0
    %158 = vmatpush1.bf16.msra.mxu0 0
    %159 = vmatprep.mubr.bf16.mxu0 0
    %160 = vmatmul.mubr.bf16.gmra.mrb[0].mxu0 %v95
    %v161 = vpop.f32.mrb[0].mxu0
    %v162 = vadd.f32 %v125, %v161
    %v163 = vpop.f32.mrb[0].mxu0
    %v164 = vpop.f32.mrb[0].mxu0
    %v165 = vadd.f32 %v125, %v164
    %v166 = vpop.f32.mrb[0].mxu0
    %167 = vdwg.mxu0
    %v168 = vadd.f32 %v52, %v162
    %v169 = vadd.f32 %v53, %v165
    %170 = vst [vmem:[#allocation9] sm:$0xff] %v168
    %171 = vst [vmem:[#allocation9 + $0x8] sm:$0xff] %v169
    // Predicated region
    $region30: #{tpu_custom_call.1} parent=1 // pred_check
      _
    $region31: #{tpu_custom_call.1} parent=1 // pred_check_branch
      %173 = sbr.rel (0) target = $region33
    $region32: #{tpu_custom_call.1} parent=1 // pred_region
      %s175 = ssub.s32 256, 256
      %176 = vsyncadd [#allocation6], %s175
      %s177 = sshll.u32 [#allocation9], 4
      %s178 = int_to_ptr.vmem [resolvable:$true] %s177
      %183 = dma.vmem_to_hbm [thread:$0]  %s178, 256, %s6, [#allocation6], 128, 128, 8
    $region33: #{tpu_custom_call.1} parent=1 // pred_fallthru
      _
    // Predicated region
    $region34: #{tpu_custom_call.1} parent=1 // pred_check
      _
    $region35: #{tpu_custom_call.1} parent=1 // pred_check_branch
      %185 = sbr.rel (0) target = $region37
    $region36: #{tpu_custom_call.1} parent=1 // pred_region
      %186 = dma.done [#allocation6], 256
    $region37: #{tpu_custom_call.1} parent=1 // pred_fallthru
      _
    %187 = vsyncpa [#allocation5], 1
    %188 = vsyncpa [#allocation8], 1
    %189 = vsyncpa [#allocation6], 1

</llo_original>
